<compile_context>
chip_gen: v7x
topology: tpu7x:2x2x1
jax: 0.10.0
libtpu: 0.0.40
codegen_flags: <defaults>
</compile_context>

<pallas_src>
import jax
import jax.numpy as jnp
from jax.experimental import pallas as pl
from jax.experimental.pallas import tpu as pltpu

EPS = 1e-5


def prenorm_kernel(x_ref, w_ref, b_ref, o_ref):
    # x_ref: (1, C, TL)  channels on sublanes, L tile on lanes
    # w_ref: (C, C)      folded conv weight W' = W * g   (resident in VMEM)
    # b_ref: (C, 1)      folded bias        b' = W @ b + wb  (f32, resident)
    x = x_ref[0].astype(jnp.float32)                      # (C, TL)

    # LayerNorm stats per (b, l) column: reduce over the C (sublane) axis.
    mean = jnp.mean(x, axis=0, keepdims=True)             # (1, TL)
    d = x - mean
    var = jnp.mean(d * d, axis=0, keepdims=True)          # two-pass variance
    inv_std = jax.lax.rsqrt(var + EPS)
    xhat = d * inv_std                                     # (C, TL)

    # 1x1 conv on the MXU: (C_out, C_in) @ (C_in, TL) -> (C_out, TL).
    y = jnp.dot(w_ref[...], xhat.astype(w_ref.dtype),
                preferred_element_type=jnp.float32)
    y = y + b_ref[...]
    o_ref[0] = y.astype(o_ref.dtype)


def _vmem_capacity_bytes():
    """Physical VMEM capacity of the current chip (conservative fallback)."""
    try:
        info = pltpu.get_tpu_info()
        for attr in ("vmem_capacity_bytes", "vmem_size_bytes", "vmem_bytes"):
            cap = getattr(info, attr, None)
            if cap:
                return int(cap)
    except Exception:
        pass
    return 64 << 20  # assume the smallest (v7x-sized) VMEM if query fails


def _choose_tile_l(L, C, itemsize, B, act_budget_bytes,
                   target_block_bytes=2 << 20):
    """Largest lane-dense L tile: ~2 MiB blocks, fits the VMEM budget,
    multiple of 256 (MXU-friendly) when possible, and leaves >= 2 grid steps
    so both v7x TensorCores get work."""
    if L <= 128:
        return L  # full extent is always a legal last block dim
    per_l_bytes = C * itemsize
    # 2 activation streams (in + out), each double-buffered -> 4 live blocks.
    max_tl = max(128, act_budget_bytes // (4 * per_l_bytes))
    target_tl = max(128, target_block_bytes // per_l_bytes)
    tl = min(L, max_tl, target_tl)
    if tl < L:
        step = 256 if tl >= 256 else 128
        tl = max(128, (tl // step) * step)
    # Megacore: keep at least 2 grid steps in total.
    if B * (-(-L // tl)) < 2:
        half = max(128, ((L // 2) // 128) * 128)
        tl = min(tl, half)
    return tl


def prenorm(x_ncl, g, b, w, wb, *, tile_l=None):
    """x_ncl: (B, C, L). Returns Conv1d_1x1(LayerNorm_C(x)) with shape (B, C, L)."""
    B, C, L = x_ncl.shape
    itemsize = x_ncl.dtype.itemsize

    # Fold the LayerNorm affine into the 1x1 conv (exact up to reassociation):
    #   y = W @ (xhat * g + b) + wb = (W * g) @ xhat + (W @ b + wb)
    w2d = w.reshape(C, C)
    g_vec = g.reshape(C).astype(jnp.float32)
    b_vec = b.reshape(C, 1).astype(jnp.float32)
    w_f32 = w2d.astype(jnp.float32)
    w_folded = (w_f32 * g_vec[None, :]).astype(w2d.dtype)   # keep bf16 weights bf16
    b_folded = w_f32 @ b_vec + wb.reshape(C, 1).astype(jnp.float32)  # (C, 1) f32

    weight_bytes = C * C * w_folded.dtype.itemsize
    bias_bytes = C * 4

    # Per-generation VMEM budget: ~48 MiB on v7x (64 MiB physical),
    # ~96 MiB on v5e/v6e (128 MiB physical).
    cap = _vmem_capacity_bytes()
    budget = max(min(cap * 3 // 4, cap - (16 << 20)), 8 << 20)
    act_budget = max(budget - weight_bytes - bias_bytes - (2 << 20), 4 << 20)

    TL = tile_l if tile_l is not None else _choose_tile_l(
        L, C, itemsize, B, act_budget)
    grid = (B, pl.cdiv(L, TL))

    block_bytes = C * TL * itemsize
    vmem_bytes = 4 * block_bytes + weight_bytes + bias_bytes + (4 << 20)
    vmem_bytes = int(min(max(vmem_bytes, 8 << 20), budget))

    cost = pl.CostEstimate(
        flops=2 * B * L * C * C,
        transcendentals=0,
        bytes_accessed=2 * B * C * L * itemsize + weight_bytes + bias_bytes,
    )

    return pl.pallas_call(
        prenorm_kernel,
        out_shape=jax.ShapeDtypeStruct((B, C, L), x_ncl.dtype),
        grid=grid,
        in_specs=[
            pl.BlockSpec((1, C, TL), lambda ib, il: (ib, 0, il)),
            # Folded weight/bias: single resident VMEM copy for the whole
            # kernel (no per-step re-DMA, no double-buffered duplicate).
            pl.BlockSpec(memory_space=pltpu.MemorySpace.VMEM),
            pl.BlockSpec(memory_space=pltpu.MemorySpace.VMEM),
        ],
        out_specs=pl.BlockSpec((1, C, TL), lambda ib, il: (ib, 0, il)),
        compiler_params=pltpu.CompilerParams(
            dimension_semantics=("parallel", "parallel"),
            vmem_limit_bytes=vmem_bytes,
        ),
        cost_estimate=cost,
    )(x_ncl, w_folded, b_folded)


def prenorm_ref(x_ncl, g, b, w, wb):
    """Pure-JAX reference matching the PyTorch module (unfused)."""
    mean = jnp.mean(x_ncl, axis=1, keepdims=True)
    var = jnp.mean((x_ncl - mean) ** 2, axis=1, keepdims=True)
    normed = (x_ncl - mean) / jnp.sqrt(var + EPS) * g + b
    # Conv1d with kernel_size=1: (B, C_in, L) x (C_out, C_in) -> (B, C_out, L)
    y = jnp.einsum("bcl,oc->bol", normed, w.reshape(w.shape[0], w.shape[1]))
    return y + wb.reshape(1, -1, 1)


if __name__ == "__main__":
    B, C, L = 2, 32, 512  # dim = 32; small, but exercises the grid + folding

    key = jax.random.PRNGKey(0)
    kx, kw, kwb = jax.random.split(key, 3)

    x = jax.random.normal(kx, (B, C, L), dtype=jnp.float32)

    # LayerNorm params as in __init__: g = ones, b = zeros
    g = jnp.ones((1, C, 1), dtype=jnp.float32)
    b = jnp.zeros((1, C, 1), dtype=jnp.float32)

    # fn = Conv1d(dim, dim, 1) params, deterministic init
    w = jax.random.normal(kw, (C, C, 1), dtype=jnp.float32) * (1.0 / jnp.sqrt(C))
    wb = jax.random.normal(kwb, (C,), dtype=jnp.float32) * 0.01

    # Auto-chosen TL -> TL = L = 512 here (one fat lane-dense block per batch),
    # grid = (2, 1): 2 grid steps, both "parallel" for megacore.
    out = prenorm(x, g, b, w, wb)
    out = jax.block_until_ready(out)

    ref = prenorm_ref(x, g, b, w, wb)
    assert out.shape == (B, C, L)
    assert jnp.allclose(out, ref, atol=1e-4, rtol=1e-4), float(
        jnp.max(jnp.abs(out - ref))
    )

    print("KERNEL_OK")
</pallas_src>

<mosaic_0001>
module attributes {stable_mosaic.version = 11 : i64} {
  func.func @prenorm_kernel(%arg0: i32, %arg1: i32, %arg2: memref<1x32x512xf32, #tpu.memory_space<vmem>>, %arg3: memref<32x32xf32, #tpu.memory_space<vmem>>, %arg4: memref<32x1xf32, #tpu.memory_space<vmem>>, %arg5: memref<1x32x512xf32, #tpu.memory_space<vmem>>) attributes {dimension_semantics = [#tpu.dimension_semantics<parallel>, #tpu.dimension_semantics<parallel>], iteration_bounds = array<i64: 2, 1>, scalar_prefetch = 0 : i64, scratch_operands = 0 : i64, tpu.core_type = #tpu.core_type<tc>, window_params = [{transform_indices = @transform_0, window_bounds = array<i64: 1, 32, 512>}, {pipeline_mode = #tpu.pipeline_mode<synchronous>, transform_indices = @transform_1, window_bounds = array<i64: 32, 32>}, {pipeline_mode = #tpu.pipeline_mode<synchronous>, transform_indices = @transform_2, window_bounds = array<i64: 32, 1>}, {transform_indices = @transform_3, window_bounds = array<i64: 1, 32, 512>}]} {
    %c0 = arith.constant 0 : index
    %c0_0 = arith.constant 0 : index
    %c0_1 = arith.constant 0 : index
    %0 = vector.load %arg2[%c0, %c0_0, %c0_1] : memref<1x32x512xf32, #tpu.memory_space<vmem>>, vector<1x32x512xf32>
    %1 = vector.shape_cast %0 : vector<1x32x512xf32> to vector<32x512xf32>
    %cst = arith.constant dense<0.000000e+00> : vector<512xf32>
    %2 = vector.multi_reduction <add>, %1, %cst [0] : vector<32x512xf32> to vector<512xf32>
    %3 = vector.shape_cast %2 : vector<512xf32> to vector<1x512xf32>
    %cst_2 = arith.constant 3.200000e+01 : f32
    %4 = vector.broadcast %cst_2 : f32 to vector<1x512xf32>
    %5 = arith.divf %3, %4 : vector<1x512xf32>
    %6 = vector.broadcast %5 : vector<1x512xf32> to vector<32x512xf32>
    %7 = arith.subf %1, %6 : vector<32x512xf32>
    %8 = arith.mulf %7, %7 : vector<32x512xf32>
    %cst_3 = arith.constant dense<0.000000e+00> : vector<512xf32>
    %9 = vector.multi_reduction <add>, %8, %cst_3 [0] : vector<32x512xf32> to vector<512xf32>
    %10 = vector.shape_cast %9 : vector<512xf32> to vector<1x512xf32>
    %cst_4 = arith.constant 3.200000e+01 : f32
    %11 = vector.broadcast %cst_4 : f32 to vector<1x512xf32>
    %12 = arith.divf %10, %11 : vector<1x512xf32>
    %cst_5 = arith.constant 9.99999974E-6 : f32
    %13 = vector.broadcast %cst_5 : f32 to vector<1x512xf32>
    %14 = arith.addf %12, %13 : vector<1x512xf32>
    %15 = math.rsqrt %14 : vector<1x512xf32>
    %16 = vector.broadcast %15 : vector<1x512xf32> to vector<32x512xf32>
    %17 = arith.mulf %7, %16 : vector<32x512xf32>
    %c0_6 = arith.constant 0 : index
    %c0_7 = arith.constant 0 : index
    %18 = vector.load %arg3[%c0_6, %c0_7] : memref<32x32xf32, #tpu.memory_space<vmem>>, vector<32x32xf32>
    %cst_8 = arith.constant dense<0.000000e+00> : vector<32x512xf32>
    %19 = tpu.matmul %18, %17, %cst_8 {dimension_numbers = #tpu.dot_dimension_numbers<[1], [0], [0], [1], [0, 0, 1, 1], [], []>} : vector<32x32xf32>, vector<32x512xf32>, vector<32x512xf32> -> vector<32x512xf32>
    %c0_9 = arith.constant 0 : index
    %c0_10 = arith.constant 0 : index
    %20 = vector.load %arg4[%c0_9, %c0_10] : memref<32x1xf32, #tpu.memory_space<vmem>>, vector<32x1xf32>
    %21 = vector.broadcast %20 : vector<32x1xf32> to vector<32x512xf32>
    %22 = arith.addf %19, %21 : vector<32x512xf32>
    %c0_11 = arith.constant 0 : index
    %c0_12 = arith.constant 0 : index
    %c0_13 = arith.constant 0 : index
    %23 = vector.load %arg5[%c0_11, %c0_12, %c0_13] : memref<1x32x512xf32, #tpu.memory_space<vmem>>, vector<1x32x512xf32>
    %24 = vector.shape_cast %23 : vector<1x32x512xf32> to vector<32x512xf32>
    %25 = vector.shape_cast %22 : vector<32x512xf32> to vector<1x32x512xf32>
    tpu.vector_store %arg5[%c0_11, %c0_12, %c0_13], %25 {strides = array<i32>} : memref<1x32x512xf32, #tpu.memory_space<vmem>>, vector<1x32x512xf32>,
    return
  }
  func.func @transform_0(%arg0: i32, %arg1: i32) -> (i32, i32, i32) {
    %c0_i32 = arith.constant 0 : i32
    %c0_i32_0 = arith.constant 0 : i32
    return %arg0, %c0_i32, %arg1 : i32, i32, i32
  }
  func.func @transform_1(%arg0: i32, %arg1: i32) -> (i32, i32) {
    %c0_i32 = arith.constant 0 : i32
    %c0_i32_0 = arith.constant 0 : i32
    %c0_i32_1 = arith.constant 0 : i32
    return %c0_i32, %c0_i32_0 : i32, i32
  }
  func.func @transform_2(%arg0: i32, %arg1: i32) -> (i32, i32) {
    %c0_i32 = arith.constant 0 : i32
    %c0_i32_0 = arith.constant 0 : i32
    %c0_i32_1 = arith.constant 0 : i32
    return %c0_i32, %c0_i32_0 : i32, i32
  }
  func.func @transform_3(%arg0: i32, %arg1: i32) -> (i32, i32, i32) {
    %c0_i32 = arith.constant 0 : i32
    %c0_i32_0 = arith.constant 0 : i32
    return %arg0, %c0_i32, %arg1 : i32, i32, i32
  }
}

</mosaic_0001>

<llo_original>
// kernel: tpu_custom_call.1
$region0: #{tpu_custom_call.1}
  #allocation0 [shape = 'u32[]', space=smem, size = 0x4, offset = 0x4, fixed_abs, tag = 'smem constant byte address 0x4 - core index']
  #allocation1 [shape = 'u32[144,128]{1,0:T(1,128)}', space=vmem, size = 0x12000, scoped, tag = 'internal scratch']
  %s0 = inlined_call_operand.hbm [shape: f32[2,32,512], index: 0, kind: input, shape index: {}]
  %s1 = inlined_call_operand.vmem [shape: f32[32,32], index: 1, kind: input, shape index: {}]
  %s2 = inlined_call_operand.vmem [shape: f32[32,1], index: 2, kind: input, shape index: {}]
  %s3 = inlined_call_operand.hbm [shape: f32[2,32,512], index: 3, kind: output, shape index: {}]
  %s4 = sld [smem:[#allocation0]]
  $region49: #{tpu_custom_call.1} parent=0
    _
  %s6 = ssub.s32 1, %s4
  %s7 = scalar_select 0, %s6, %s4
  $region1: #{tpu_custom_call.1} parent=0
    #allocation2 [shape = 'u8[131072]{0}', space=vmem, size = 0x20000, scoped, tag = 'input window, operand 0']
    #allocation3 [shape = 's32[2]{0}', space=sflag, size = 0x8, scoped, tag = 'scoped memory for tpu_custom_call.1']
    #allocation4 [shape = 's32[2]{0}', space=sflag, size = 0x8, scoped, tag = 'scoped memory for tpu_custom_call.1']
    #allocation5 [shape = 'u8[131072]{0}', space=vmem, size = 0x20000, scoped, tag = 'output window, operand 0']
    %8 = vsyncpa [#allocation3], 0
    %s9 = scalar_lea.sflag [#allocation3], 1
    %10 = vsyncpa %s9, 0
    %11 = vsyncpa [#allocation4], 0
    %s12 = scalar_lea.sflag [#allocation4], 1
    %13 = vsyncpa %s12, 0
    loop: start=0, step=1, limit=4
    $region2: #{tpu_custom_call.1} parent=1 // loop_pre_header
      _
    $region3: #{tpu_custom_call.1} parent=1 // loop_header
      %s15 = sphi 0, %s19
      %p16 = scmp.ge.s32.totalorder %s15, 4
      %s22 = sphi 0, %s34
      %s23 = sphi 0, %s30
      %s24 = sphi 0, %s22
      %s25 = sphi 0, %s23
      %s26 = sphi 0, %s24
      %s27 = sphi 0, %s25
      %s39 = sphi 0, %s41
      %s42 = sphi 0, %s39
      %s43 = sphi 0, %s42
      %s59 = sphi 0, %s43
      %s63 = sphi 0, %s63
      %s65 = sphi 0, %s63
      %s66 = sphi 0, %s65
      %s80 = sphi 0, %s66
      %s84 = sphi 0, %s84
      %s86 = sphi 0, %s84
      %s87 = sphi 0, %s86
      %s101 = sphi 0, %s87
      %s109 = sphi 0, %s111
      %s112 = sphi 0, %s109
      %s113 = sphi 0, %s112
      %s129 = sphi 0, %s113
    $region4: #{tpu_custom_call.1} parent=1 // loop_header_branch
      %18 = sbr.rel (%p16) target = $region8
    $region5: #{tpu_custom_call.1} parent=1 // loop_body
      %s20 = ssub.s32 %s15, 1
      %s21 = ssub.s32 %s15, 2
      %s28 = sadd.s32 1, %s23
      %p29 = scmp.ge.s32.totalorder %s28, 1
      %s30 = scalar_select %p29, 0, %s28
      %s31 = sadd.s32 1, %s22
      %s32 = scalar_select %p29, %s31, %s22
      %p33 = scmp.ge.s32.totalorder %s32, 2
      %s34 = scalar_select %p33, 0, %s32
      %s35 = ssub.s32 %s22, %s34
      %s36 = ssub.s32 %s23, %s30
      %s37 = sor.u32 %s35, %s36
      %p38 = scmp.eq.s32.totalorder %s37, 0
      %s40 = sadd.s32 %s39, 1
      %s41 = scalar_select %p38, %s39, %s40
      %p44 = pneg %p38
      %p45 = scmp.eq.s32.totalorder %s15, 1
      %p46 = por %p44, %p45
      %p47 = scmp.ne.s32.totalorder %s39, %s42
      %p48 = scmp.eq.s32.totalorder %s15, 0
      %p49 = por %p47, %p48
      %p50 = scmp.ne.s32.totalorder %s39, %s42
      %p51 = scmp.eq.s32.totalorder %s20, 1
      %p52 = por %p50, %p51
      %p53 = scmp.ne.s32.totalorder %s42, %s43
      %p54 = scmp.eq.s32.totalorder %s20, 0
      %p55 = por %p53, %p54
      %p56 = scmp.ne.s32.totalorder %s42, %s43
      %p57 = scmp.eq.s32.totalorder %s21, 1
      %p58 = por %p56, %p57
      %p60 = scmp.ne.s32.totalorder %s43, %s59
      %p61 = scmp.eq.s32.totalorder %s21, 0
      %p62 = por %p60, %p61
      %s64 = sadd.s32 %s63, 1
      %p67 = scmp.eq.s32.totalorder %s15, 1
      %p68 = scmp.ne.s32.totalorder %s63, %s65
      %p69 = scmp.eq.s32.totalorder %s15, 0
      %p70 = por %p68, %p69
      %p71 = scmp.ne.s32.totalorder %s63, %s65
      %p72 = scmp.eq.s32.totalorder %s20, 1
      %p73 = por %p71, %p72
      %p74 = scmp.ne.s32.totalorder %s65, %s66
      %p75 = scmp.eq.s32.totalorder %s20, 0
      %p76 = por %p74, %p75
      %p77 = scmp.ne.s32.totalorder %s65, %s66
      %p78 = scmp.eq.s32.totalorder %s21, 1
      %p79 = por %p77, %p78
      %p81 = scmp.ne.s32.totalorder %s66, %s80
      %p82 = scmp.eq.s32.totalorder %s21, 0
      %p83 = por %p81, %p82
      %s85 = sadd.s32 %s84, 1
      %p88 = scmp.eq.s32.totalorder %s15, 1
      %p89 = scmp.ne.s32.totalorder %s84, %s86
      %p90 = scmp.eq.s32.totalorder %s15, 0
      %p91 = por %p89, %p90
      %p92 = scmp.ne.s32.totalorder %s84, %s86
      %p93 = scmp.eq.s32.totalorder %s20, 1
      %p94 = por %p92, %p93
      %p95 = scmp.ne.s32.totalorder %s86, %s87
      %p96 = scmp.eq.s32.totalorder %s20, 0
      %p97 = por %p95, %p96
      %p98 = scmp.ne.s32.totalorder %s86, %s87
      %p99 = scmp.eq.s32.totalorder %s21, 1
      %p100 = por %p98, %p99
      %p102 = scmp.ne.s32.totalorder %s87, %s101
      %p103 = scmp.eq.s32.totalorder %s21, 0
      %p104 = por %p102, %p103
      %s105 = ssub.s32 %s22, %s34
      %s106 = ssub.s32 %s23, %s30
      %s107 = sor.u32 %s105, %s106
      %p108 = scmp.eq.s32.totalorder %s107, 0
      %s110 = sadd.s32 %s109, 1
      %s111 = scalar_select %p108, %s109, %s110
      %p114 = pneg %p108
      %p115 = scmp.eq.s32.totalorder %s15, 1
      %p116 = por %p114, %p115
      %p117 = scmp.ne.s32.totalorder %s109, %s112
      %p118 = scmp.eq.s32.totalorder %s15, 0
      %p119 = por %p117, %p118
      %p120 = scmp.ne.s32.totalorder %s109, %s112
      %p121 = scmp.eq.s32.totalorder %s20, 1
      %p122 = por %p120, %p121
      %p123 = scmp.ne.s32.totalorder %s112, %s113
      %p124 = scmp.eq.s32.totalorder %s20, 0
      %p125 = por %p123, %p124
      %p126 = scmp.ne.s32.totalorder %s112, %s113
      %p127 = scmp.eq.s32.totalorder %s21, 1
      %p128 = por %p126, %p127
      %p130 = scmp.ne.s32.totalorder %s113, %s129
      %p131 = scmp.eq.s32.totalorder %s21, 0
      %p132 = por %p130, %p131
      %p133 = scmp.le.s32.totalorder 1, %s15
      %p134 = scmp.lt.s32.totalorder %s15, 3
      %p135 = pnand %p133, %p134
      %p136 = pneg %p135
      // Predicated region
      $region9: #{tpu_custom_call.1} parent=5 // pred_check
        _
      $region10: #{tpu_custom_call.1} parent=5 // pred_check_branch
        %138 = sbr.rel (%p135) target = $region12
      $region11: #{tpu_custom_call.1} parent=5 // pred_region
        %s139 = ssub.s32 %s15, 1
        // Predicated region
        $region13: #{tpu_custom_call.1} parent=11 // pred_check
          %p140 = pneg %p76
        $region14: #{tpu_custom_call.1} parent=11 // pred_check_branch
          %142 = sbr.rel (%p140) target = $region16
        $region15: #{tpu_custom_call.1} parent=11 // pred_region
          _
        $region16: #{tpu_custom_call.1} parent=11 // pred_fallthru
          _
        // Predicated region
        $region17: #{tpu_custom_call.1} parent=11 // pred_check
          %p143 = pneg %p97
        $region18: #{tpu_custom_call.1} parent=11 // pred_check_branch
          %145 = sbr.rel (%p143) target = $region20
        $region19: #{tpu_custom_call.1} parent=11 // pred_region
          _
        $region20: #{tpu_custom_call.1} parent=11 // pred_fallthru
          _
      $region12: #{tpu_custom_call.1} parent=5 // pred_fallthru
        _
      %p146 = scmp.lt.s32.totalorder %s15, 2
      // Predicated region
      $region21: #{tpu_custom_call.1} parent=5 // pred_check
        %p147 = pneg %p146
      $region22: #{tpu_custom_call.1} parent=5 // pred_check_branch
        %149 = sbr.rel (%p147) target = $region24
      $region23: #{tpu_custom_call.1} parent=5 // pred_region
        // Predicated region
        $region25: #{tpu_custom_call.1} parent=23 // pred_check
          %p150 = pneg %p49
        $region26: #{tpu_custom_call.1} parent=23 // pred_check_branch
          %152 = sbr.rel (%p150) target = $region28
        $region27: #{tpu_custom_call.1} parent=23 // pred_region
          %s153 = sand.u32 %s39, 1
          %s154 = scalar_lea.sflag [#allocation3], %s153
          %s155 = sand.u32 %s39, 1
          %s156 = smul.addr %s155, 128
          %s157 = scalar_lea.vmem [#allocation2], %s156
          %s158 = smul.u32 4, %s23
          %s160 = ssub.s32 2048, 2048
          %161 = vsyncadd %s154, %s160
          %s162 = smul.addr %s22, 16
          %s163 = sadd.s32 %s158, %s162
          %s164 = smul.addr %s163, 128
          %s165 = scalar_lea.hbm %s0, %s164
          %s166 = sshll.u32 %s157, 4
          %s167 = int_to_ptr.vmem [resolvable:$true] %s166
          %172 = dma.hbm_to_vmem [thread:$0]  %s165, 2048, %s167, %s154, 512, 512, 32
        $region28: #{tpu_custom_call.1} parent=23 // pred_fallthru
          _
      $region24: #{tpu_custom_call.1} parent=5 // pred_fallthru
        _
      %p173 = scmp.le.s32.totalorder 1, %s15
      %p174 = scmp.lt.s32.totalorder %s15, 3
      %p175 = pnand %p173, %p174
      %p176 = pneg %p175
      // Predicated region
      $region29: #{tpu_custom_call.1} parent=5 // pred_check
        _
      $region30: #{tpu_custom_call.1} parent=5 // pred_check_branch
        %178 = sbr.rel (%p175) target = $region32
      $region31: #{tpu_custom_call.1} parent=5 // pred_region
        %s179 = ssub.s32 %s15, 1
        %s180 = sand.u32 %s42, 1
        %s181 = scalar_lea.sflag [#allocation3], %s180
        %s182 = sand.u32 %s42, 1
        %s183 = smul.addr %s182, 128
        %s184 = scalar_lea.vmem [#allocation2], %s183
        // Predicated region
        $region33: #{tpu_custom_call.1} parent=31 // pred_check
          %p185 = pneg %p55
        $region34: #{tpu_custom_call.1} parent=31 // pred_check_branch
          %187 = sbr.rel (%p185) target = $region36
        $region35: #{tpu_custom_call.1} parent=31 // pred_region
          %188 = dma.done %s181, 2048
        $region36: #{tpu_custom_call.1} parent=31 // pred_fallthru
          _
        %s189 = sand.u32 %s42, 1
        %s190 = scalar_lea.sflag [#allocation3], %s189
        %s191 = sand.u32 %s42, 1
        %s192 = smul.addr %s191, 128
        %s193 = scalar_lea.vmem [#allocation2], %s192
        %p194 = pneg %p55
        %p195 = pneg %p52
        %p196 = pneg %p76
        %p197 = pneg %p73
        %p198 = pneg %p97
        %p199 = pneg %p94
        %p200 = pneg %p125
        %p201 = pneg %p122
        %s202 = sand.u32 %s112, 1
        %s203 = scalar_lea.sflag [#allocation4], %s202
        %s204 = sand.u32 %s112, 1
        %s205 = smul.addr %s204, 128
        %s206 = scalar_lea.vmem [#allocation5], %s205
        %s207 = smul.u32 4, %s25
        %s208 = smul.u32 4, %s25
        %v209 = vld [vmem:[%s184] sm:$0xff]
        %v210 = vld [vmem:[%s184 + $0x8] sm:$0xff]
        %v211 = vld [vmem:[%s184 + $0x10] sm:$0xff]
        %v212 = vld [vmem:[%s184 + $0x18] sm:$0xff]
        %v213 = vld [vmem:[%s184 + $0x20] sm:$0xff]
        %v214 = vld [vmem:[%s184 + $0x28] sm:$0xff]
        %v215 = vld [vmem:[%s184 + $0x30] sm:$0xff]
        %v216 = vld [vmem:[%s184 + $0x38] sm:$0xff]
        %v217 = vld [vmem:[%s184 + $0x40] sm:$0xff]
        %v218 = vld [vmem:[%s184 + $0x48] sm:$0xff]
        %v219 = vld [vmem:[%s184 + $0x50] sm:$0xff]
        %v220 = vld [vmem:[%s184 + $0x58] sm:$0xff]
        %v221 = vld [vmem:[%s184 + $0x60] sm:$0xff]
        %v222 = vld [vmem:[%s184 + $0x68] sm:$0xff]
        %v223 = vld [vmem:[%s184 + $0x70] sm:$0xff]
        %v224 = vld [vmem:[%s184 + $0x78] sm:$0xff]
        %v225 = vadd.f32 %v209, %v213
        %v226 = vadd.f32 %v225, %v217
        %v227 = vadd.f32 %v226, %v221
        %v228 = vrot.slane %v227, 4
        %v229 = vadd.f32 %v227, %v228
        %v230 = vrot.slane %v229, 2
        %v231 = vadd.f32 %v229, %v230
        %v232 = vrot.slane %v231, 1
        %v233 = vadd.f32 %v231, %v232
        %v234 = vadd.f32 %v210, %v214
        %v235 = vadd.f32 %v234, %v218
        %v236 = vadd.f32 %v235, %v222
        %v237 = vrot.slane %v236, 4
        %v238 = vadd.f32 %v236, %v237
        %v239 = vrot.slane %v238, 2
        %v240 = vadd.f32 %v238, %v239
        %v241 = vrot.slane %v240, 1
        %v242 = vadd.f32 %v240, %v241
        %v243 = vadd.f32 %v211, %v215
        %v244 = vadd.f32 %v243, %v219
        %v245 = vadd.f32 %v244, %v223
        %v246 = vrot.slane %v245, 4
        %v247 = vadd.f32 %v245, %v246
        %v248 = vrot.slane %v247, 2
        %v249 = vadd.f32 %v247, %v248
        %v250 = vrot.slane %v249, 1
        %v251 = vadd.f32 %v249, %v250
        %v252 = vadd.f32 %v212, %v216
        %v253 = vadd.f32 %v252, %v220
        %v254 = vadd.f32 %v253, %v224
        %v255 = vrot.slane %v254, 4
        %v256 = vadd.f32 %v254, %v255
        %v257 = vrot.slane %v256, 2
        %v258 = vadd.f32 %v256, %v257
        %v259 = vrot.slane %v258, 1
        %v260 = vadd.f32 %v258, %v259
        %v261 = vrcp.pop 32.0
        %v262 = vmul.f32 %v233, %v261
        %v263 = vmul.f32 %v242, %v261
        %v264 = vmul.f32 %v251, %v261
        %v265 = vmul.f32 %v260, %v261
        %v266 = vsub.f32 %v209, %v262
        %v267 = vsub.f32 %v210, %v263
        %v268 = vsub.f32 %v211, %v264
        %v269 = vsub.f32 %v212, %v265
        %v270 = vsub.f32 %v213, %v262
        %v271 = vsub.f32 %v214, %v263
        %v272 = vsub.f32 %v215, %v264
        %v273 = vsub.f32 %v216, %v265
        %v274 = vsub.f32 %v217, %v262
        %v275 = vsub.f32 %v218, %v263
        %v276 = vsub.f32 %v219, %v264
        %v277 = vsub.f32 %v220, %v265
        %v278 = vsub.f32 %v221, %v262
        %v279 = vsub.f32 %v222, %v263
        %v280 = vsub.f32 %v223, %v264
        %v281 = vsub.f32 %v224, %v265
        %v282 = vmul.f32 %v266, %v266
        %v283 = vmul.f32 %v267, %v267
        %v284 = vmul.f32 %v268, %v268
        %v285 = vmul.f32 %v269, %v269
        %v286 = vmul.f32 %v270, %v270
        %v287 = vmul.f32 %v271, %v271
        %v288 = vmul.f32 %v272, %v272
        %v289 = vmul.f32 %v273, %v273
        %v290 = vmul.f32 %v274, %v274
        %v291 = vmul.f32 %v275, %v275
        %v292 = vmul.f32 %v276, %v276
        %v293 = vmul.f32 %v277, %v277
        %v294 = vmul.f32 %v278, %v278
        %v295 = vmul.f32 %v279, %v279
        %v296 = vmul.f32 %v280, %v280
        %v297 = vmul.f32 %v281, %v281
        %v298 = vadd.f32 %v282, %v286
        %v299 = vadd.f32 %v298, %v290
        %v300 = vadd.f32 %v299, %v294
        %v301 = vrot.slane %v300, 4
        %v302 = vadd.f32 %v300, %v301
        %v303 = vrot.slane %v302, 2
        %v304 = vadd.f32 %v302, %v303
        %v305 = vrot.slane %v304, 1
        %v306 = vadd.f32 %v304, %v305
        %v307 = vadd.f32 %v283, %v287
        %v308 = vadd.f32 %v307, %v291
        %v309 = vadd.f32 %v308, %v295
        %v310 = vrot.slane %v309, 4
        %v311 = vadd.f32 %v309, %v310
        %v312 = vrot.slane %v311, 2
        %v313 = vadd.f32 %v311, %v312
        %v314 = vrot.slane %v313, 1
        %v315 = vadd.f32 %v313, %v314
        %v316 = vadd.f32 %v284, %v288
        %v317 = vadd.f32 %v316, %v292
        %v318 = vadd.f32 %v317, %v296
        %v319 = vrot.slane %v318, 4
        %v320 = vadd.f32 %v318, %v319
        %v321 = vrot.slane %v320, 2
        %v322 = vadd.f32 %v320, %v321
        %v323 = vrot.slane %v322, 1
        %v324 = vadd.f32 %v322, %v323
        %v325 = vadd.f32 %v285, %v289
        %v326 = vadd.f32 %v325, %v293
        %v327 = vadd.f32 %v326, %v297
        %v328 = vrot.slane %v327, 4
        %v329 = vadd.f32 %v327, %v328
        %v330 = vrot.slane %v329, 2
        %v331 = vadd.f32 %v329, %v330
        %v332 = vrot.slane %v331, 1
        %v333 = vadd.f32 %v331, %v332
        %v334 = vmul.f32 %v306, %v261
        %v335 = vmul.f32 %v315, %v261
        %v336 = vmul.f32 %v324, %v261
        %v337 = vmul.f32 %v333, %v261
        %v338 = vadd.f32 %v334, 1e-05
        %v339 = vadd.f32 %v335, 1e-05
        %v340 = vadd.f32 %v336, 1e-05
        %v341 = vadd.f32 %v337, 1e-05
        %v342 = vrsqrt.pop %v338
        %v343 = vrsqrt.pop %v339
        %v344 = vrsqrt.pop %v340
        %v345 = vrsqrt.pop %v341
        %v346 = vmul.f32 %v266, %v342
        %v347 = vmul.f32 %v267, %v343
        %v348 = vmul.f32 %v268, %v344
        %v349 = vmul.f32 %v269, %v345
        %v350 = vmul.f32 %v270, %v342
        %v351 = vmul.f32 %v271, %v343
        %v352 = vmul.f32 %v272, %v344
        %v353 = vmul.f32 %v273, %v345
        %v354 = vmul.f32 %v274, %v342
        %v355 = vmul.f32 %v275, %v343
        %v356 = vmul.f32 %v276, %v344
        %v357 = vmul.f32 %v277, %v345
        %v358 = vmul.f32 %v278, %v342
        %v359 = vmul.f32 %v279, %v343
        %v360 = vmul.f32 %v280, %v344
        %v361 = vmul.f32 %v281, %v345
        %v362 = vld [vmem:[%s1] sm:$0xff]
        %v363 = vld [vmem:[%s1 + $0x8] sm:$0xff]
        %v364 = vld [vmem:[%s1 + $0x10] sm:$0xff]
        %v365 = vld [vmem:[%s1 + $0x18] sm:$0xff]
        %v366 = vld [vmem:[%s2] sm:$0xff]
        %v367 = vld [vmem:[%s2 + $0x8] sm:$0xff]
        %v368 = vld [vmem:[%s2 + $0x10] sm:$0xff]
        %v369 = vld [vmem:[%s2 + $0x18] sm:$0xff]
        %371 = vset.pattern.permute.xlu0 0
        %372 = vperm.xlu0 %371, %v366
        %v373 = vpop.permute.xlu0 %372
        %376 = vset.pattern.permute.xlu0 0
        %377 = vperm.xlu0 %376, %v367
        %v378 = vpop.permute.xlu0 %377
        %381 = vset.pattern.permute.xlu0 0
        %382 = vperm.xlu0 %381, %v368
        %v383 = vpop.permute.xlu0 %382
        %386 = vset.pattern.permute.xlu0 0
        %387 = vperm.xlu0 %386, %v369
        %v388 = vpop.permute.xlu0 %387
        %vm390 = vcmask 261120
        %v392 = vsel %vm390, %v362, 0
        %v395 = vsel %vm390, %v363, 0
        %v398 = vsel %vm390, %v364, 0
        %v401 = vsel %vm390, %v365, 0
        %403 = vmatprep.subr.mxu0 %v347
        %404 = vmatpush1.msra.mxu0 %v346
        %405 = vmatprep.subr.mxu0 %v351
        %406 = vmatpush1.msra.mxu0 %v350
        %407 = vmatprep.subr.mxu0 %v355
        %408 = vmatpush1.msra.mxu0 %v354
        %409 = vmatprep.subr.mxu0 %v359
        %410 = vmatpush1.msra.mxu0 %v358
        %411 = vmatprep.subr.mxu0 0.0
        %412 = vmatpush1.msra.mxu0 0.0
        %413 = vmatprep.subr.mxu0 0.0
        %414 = vmatpush1.msra.mxu0 0.0
        %415 = vmatprep.subr.mxu0 0.0
        %416 = vmatpush1.msra.mxu0 0.0
        %417 = vmatprep.subr.mxu0 0.0
        %418 = vmatpush1.msra.mxu0 0.0
        %419 = vmatprep.subr.mxu0 0.0
        %420 = vmatpush1.msra.mxu0 0.0
        %421 = vmatprep.subr.mxu0 0.0
        %422 = vmatpush1.msra.mxu0 0.0
        %423 = vmatprep.subr.mxu0 0.0
        %424 = vmatpush1.msra.mxu0 0.0
        %425 = vmatprep.subr.mxu0 0.0
        %426 = vmatpush1.msra.mxu0 0.0
        %427 = vmatprep.subr.mxu0 0.0
        %428 = vmatpush1.msra.mxu0 0.0
        %429 = vmatprep.subr.mxu0 0.0
        %430 = vmatpush1.msra.mxu0 0.0
        %431 = vmatprep.subr.mxu0 0.0
        %432 = vmatpush1.msra.mxu0 0.0
        %433 = vmatprep.subr.mxu0 0.0
        %434 = vmatpush1.msra.mxu0 0.0
        %435 = vmatprep.subr.mxu0 0.0
        %436 = vmatpush1.msra.mxu0 0.0
        %437 = vmatprep.subr.mxu0 0.0
        %438 = vmatpush1.msra.mxu0 0.0
        %439 = vmatprep.subr.mxu0 0.0
        %440 = vmatpush1.msra.mxu0 0.0
        %441 = vmatprep.subr.mxu0 0.0
        %442 = vmatpush1.msra.mxu0 0.0
        %443 = vmatprep.subr.mxu0 0.0
        %444 = vmatpush1.msra.mxu0 0.0
        %445 = vmatprep.subr.mxu0 0.0
        %446 = vmatpush1.msra.mxu0 0.0
        %447 = vmatprep.subr.mxu0 0.0
        %448 = vmatpush1.msra.mxu0 0.0
        %449 = vmatprep.subr.mxu0 0.0
        %450 = vmatpush1.msra.mxu0 0.0
        %451 = vmatprep.subr.mxu0 0.0
        %452 = vmatpush1.msra.mxu0 0.0
        %453 = vmatprep.subr.mxu0 0.0
        %454 = vmatpush1.msra.mxu0 0.0
        %455 = vmatprep.subr.mxu0 0.0
        %456 = vmatpush1.msra.mxu0 0.0
        %457 = vmatprep.subr.mxu0 0.0
        %458 = vmatpush1.msra.mxu0 0.0
        %459 = vmatprep.subr.mxu0 0.0
        %460 = vmatpush1.msra.mxu0 0.0
        %461 = vmatprep.subr.mxu0 0.0
        %462 = vmatpush1.msra.mxu0 0.0
        %463 = vmatprep.subr.mxu0 0.0
        %464 = vmatpush1.msra.mxu0 0.0
        %465 = vmatprep.subr.mxu0 0.0
        %466 = vmatpush1.msra.mxu0 0.0
        %467 = vmatprep.mubr.f32.mxu0 0.0
        %468 = vmatmul.mubr.f32.gmra.mrb[0].mxu0 %v392
        %v469 = vpop.f32.mrb[0].mxu0
        %v470 = vadd.f32 %v373, %v469
        %v471 = vpop.f32.mrb[0].mxu0
        %v472 = vadd.f32 %v373, %v471
        %473 = vmatprep.mubr.f32.mxu0 0.0
        %474 = vmatmul.mubr.f32.gmra.mrb[0].mxu0 %v395
        %v475 = vpop.f32.mrb[0].mxu0
        %v476 = vadd.f32 %v378, %v475
        %v477 = vpop.f32.mrb[0].mxu0
        %v478 = vadd.f32 %v378, %v477
        %479 = vmatprep.mubr.f32.mxu0 0.0
        %480 = vmatmul.mubr.f32.gmra.mrb[0].mxu0 %v398
        %v481 = vpop.f32.mrb[0].mxu0
        %v482 = vadd.f32 %v383, %v481
        %v483 = vpop.f32.mrb[0].mxu0
        %v484 = vadd.f32 %v383, %v483
        %485 = vmatprep.mubr.f32.mxu0 0.0
        %486 = vmatmul.mubr.f32.gmra.mrb[0].mxu0 %v401
        %v487 = vpop.f32.mrb[0].mxu0
        %v488 = vadd.f32 %v388, %v487
        %v489 = vpop.f32.mrb[0].mxu0
        %v490 = vadd.f32 %v388, %v489
        %491 = vdwg.mxu0
        %492 = vmatprep.subr.mxu0 %v349
        %493 = vmatpush1.msra.mxu0 %v348
        %494 = vmatprep.subr.mxu0 %v353
        %495 = vmatpush1.msra.mxu0 %v352
        %496 = vmatprep.subr.mxu0 %v357
        %497 = vmatpush1.msra.mxu0 %v356
        %498 = vmatprep.subr.mxu0 %v361
        %499 = vmatpush1.msra.mxu0 %v360
        %500 = vmatprep.subr.mxu0 0.0
        %501 = vmatpush1.msra.mxu0 0.0
        %502 = vmatprep.subr.mxu0 0.0
        %503 = vmatpush1.msra.mxu0 0.0
        %504 = vmatprep.subr.mxu0 0.0
        %505 = vmatpush1.msra.mxu0 0.0
        %506 = vmatprep.subr.mxu0 0.0
        %507 = vmatpush1.msra.mxu0 0.0
        %508 = vmatprep.subr.mxu0 0.0
        %509 = vmatpush1.msra.mxu0 0.0
        %510 = vmatprep.subr.mxu0 0.0
        %511 = vmatpush1.msra.mxu0 0.0
        %512 = vmatprep.subr.mxu0 0.0
        %513 = vmatpush1.msra.mxu0 0.0
        %514 = vmatprep.subr.mxu0 0.0
        %515 = vmatpush1.msra.mxu0 0.0
        %516 = vmatprep.subr.mxu0 0.0
        %517 = vmatpush1.msra.mxu0 0.0
        %518 = vmatprep.subr.mxu0 0.0
        %519 = vmatpush1.msra.mxu0 0.0
        %520 = vmatprep.subr.mxu0 0.0
        %521 = vmatpush1.msra.mxu0 0.0
        %522 = vmatprep.subr.mxu0 0.0
        %523 = vmatpush1.msra.mxu0 0.0
        %524 = vmatprep.subr.mxu0 0.0
        %525 = vmatpush1.msra.mxu0 0.0
        %526 = vmatprep.subr.mxu0 0.0
        %527 = vmatpush1.msra.mxu0 0.0
        %528 = vmatprep.subr.mxu0 0.0
        %529 = vmatpush1.msra.mxu0 0.0
        %530 = vmatprep.subr.mxu0 0.0
        %531 = vmatpush1.msra.mxu0 0.0
        %532 = vmatprep.subr.mxu0 0.0
        %533 = vmatpush1.msra.mxu0 0.0
        %534 = vmatprep.subr.mxu0 0.0
        %535 = vmatpush1.msra.mxu0 0.0
        %536 = vmatprep.subr.mxu0 0.0
        %537 = vmatpush1.msra.mxu0 0.0
        %538 = vmatprep.subr.mxu0 0.0
        %539 = vmatpush1.msra.mxu0 0.0
        %540 = vmatprep.subr.mxu0 0.0
        %541 = vmatpush1.msra.mxu0 0.0
        %542 = vmatprep.subr.mxu0 0.0
        %543 = vmatpush1.msra.mxu0 0.0
        %544 = vmatprep.subr.mxu0 0.0
        %545 = vmatpush1.msra.mxu0 0.0
        %546 = vmatprep.subr.mxu0 0.0
        %547 = vmatpush1.msra.mxu0 0.0
        %548 = vmatprep.subr.mxu0 0.0
        %549 = vmatpush1.msra.mxu0 0.0
        %550 = vmatprep.subr.mxu0 0.0
        %551 = vmatpush1.msra.mxu0 0.0
        %552 = vmatprep.subr.mxu0 0.0
        %553 = vmatpush1.msra.mxu0 0.0
        %554 = vmatprep.subr.mxu0 0.0
        %555 = vmatpush1.msra.mxu0 0.0
        %556 = vmatprep.mubr.f32.mxu0 0.0
        %557 = vmatmul.mubr.f32.gmra.mrb[0].mxu0 %v392
        %v558 = vpop.f32.mrb[0].mxu0
        %v559 = vadd.f32 %v373, %v558
        %v560 = vpop.f32.mrb[0].mxu0
        %v561 = vadd.f32 %v373, %v560
        %562 = vmatprep.mubr.f32.mxu0 0.0
        %563 = vmatmul.mubr.f32.gmra.mrb[0].mxu0 %v395
        %v564 = vpop.f32.mrb[0].mxu0
        %v565 = vadd.f32 %v378, %v564
        %v566 = vpop.f32.mrb[0].mxu0
        %v567 = vadd.f32 %v378, %v566
        %568 = vmatprep.mubr.f32.mxu0 0.0
        %569 = vmatmul.mubr.f32.gmra.mrb[0].mxu0 %v398
        %v570 = vpop.f32.mrb[0].mxu0
        %v571 = vadd.f32 %v383, %v570
        %v572 = vpop.f32.mrb[0].mxu0
        %v573 = vadd.f32 %v383, %v572
        %574 = vmatprep.mubr.f32.mxu0 0.0
        %575 = vmatmul.mubr.f32.gmra.mrb[0].mxu0 %v401
        %v576 = vpop.f32.mrb[0].mxu0
        %v577 = vadd.f32 %v388, %v576
        %v578 = vpop.f32.mrb[0].mxu0
        %v579 = vadd.f32 %v388, %v578
        %580 = vdwg.mxu0
        %581 = vst [vmem:[%s206] sm:$0xff] %v470
        %582 = vst [vmem:[%s206 + $0x8] sm:$0xff] %v472
        %583 = vst [vmem:[%s206 + $0x10] sm:$0xff] %v559
        %584 = vst [vmem:[%s206 + $0x18] sm:$0xff] %v561
        %585 = vst [vmem:[%s206 + $0x20] sm:$0xff] %v476
        %586 = vst [vmem:[%s206 + $0x28] sm:$0xff] %v478
        %587 = vst [vmem:[%s206 + $0x30] sm:$0xff] %v565
        %588 = vst [vmem:[%s206 + $0x38] sm:$0xff] %v567
        %589 = vst [vmem:[%s206 + $0x40] sm:$0xff] %v482
        %590 = vst [vmem:[%s206 + $0x48] sm:$0xff] %v484
        %591 = vst [vmem:[%s206 + $0x50] sm:$0xff] %v571
        %592 = vst [vmem:[%s206 + $0x58] sm:$0xff] %v573
        %593 = vst [vmem:[%s206 + $0x60] sm:$0xff] %v488
        %594 = vst [vmem:[%s206 + $0x68] sm:$0xff] %v490
        %595 = vst [vmem:[%s206 + $0x70] sm:$0xff] %v577
        %596 = vst [vmem:[%s206 + $0x78] sm:$0xff] %v579
        %s597 = sand.u32 %s112, 1
        %s598 = scalar_lea.sflag [#allocation4], %s597
        %s599 = sand.u32 %s112, 1
        %s600 = smul.addr %s599, 128
        %s601 = scalar_lea.vmem [#allocation5], %s600
        // Predicated region
        $region37: #{tpu_custom_call.1} parent=31 // pred_check
          %p602 = pneg %p122
        $region38: #{tpu_custom_call.1} parent=31 // pred_check_branch
          %604 = sbr.rel (%p602) target = $region40
        $region39: #{tpu_custom_call.1} parent=31 // pred_region
          %s605 = smul.u32 4, %s25
          %s607 = ssub.s32 2048, 2048
          %608 = vsyncadd %s598, %s607
          %s609 = smul.addr %s24, 16
          %s610 = sadd.s32 %s605, %s609
          %s611 = smul.addr %s610, 128
          %s612 = scalar_lea.hbm %s3, %s611
          %s613 = sshll.u32 %s601, 4
          %s614 = int_to_ptr.vmem [resolvable:$true] %s613
          %619 = dma.vmem_to_hbm [thread:$0]  %s614, 2048, %s612, %s598, 512, 512, 32
        $region40: #{tpu_custom_call.1} parent=31 // pred_fallthru
          _
      $region32: #{tpu_custom_call.1} parent=5 // pred_fallthru
        _
      %p620 = scmp.le.s32.totalorder 2, %s15
      // Predicated region
      $region41: #{tpu_custom_call.1} parent=5 // pred_check
        %p621 = pneg %p620
      $region42: #{tpu_custom_call.1} parent=5 // pred_check_branch
        %623 = sbr.rel (%p621) target = $region44
      $region43: #{tpu_custom_call.1} parent=5 // pred_region
        %s624 = ssub.s32 %s15, 2
        // Predicated region
        $region45: #{tpu_custom_call.1} parent=43 // pred_check
          %p625 = pneg %p128
        $region46: #{tpu_custom_call.1} parent=43 // pred_check_branch
          %627 = sbr.rel (%p625) target = $region48
        $region47: #{tpu_custom_call.1} parent=43 // pred_region
          %s628 = sand.u32 %s113, 1
          %s629 = scalar_lea.sflag [#allocation4], %s628
          %s630 = sand.u32 %s113, 1
          %s631 = smul.addr %s630, 128
          %s632 = scalar_lea.vmem [#allocation5], %s631
          %633 = dma.done %s629, 2048
        $region48: #{tpu_custom_call.1} parent=43 // pred_fallthru
          _
      $region44: #{tpu_custom_call.1} parent=5 // pred_fallthru
        _
    $region6: #{tpu_custom_call.1} parent=1 // loop_footer
      %s19 = sadd.s32 1, %s15
    $region7: #{tpu_custom_call.1} parent=1 // loop_footer_branch
      %14 = sbr.rel target = $region3
    $region8: #{tpu_custom_call.1} parent=1 // loop_exit
      _
    %634 = vsyncpa [#allocation3], 1
    %s635 = scalar_lea.sflag [#allocation3], 1
    %636 = vsyncpa %s635, 1
    %637 = vsyncpa [#allocation4], 1
    %s638 = scalar_lea.sflag [#allocation4], 1
    %639 = vsyncpa %s638, 1

</llo_original>
